<compile_context>
chip_gen: v5e
topology: v5e:2x2
jax: 0.10.0
libtpu: 0.0.40
codegen_flags: <defaults>
</compile_context>

<pallas_src>
import jax
import jax.numpy as jnp
from jax.experimental import pallas as pl
from jax.experimental.pallas import tpu as pltpu


def channel_attention_kernel(x_ref, w1_ref, w2_ref, o_ref):
    # x_ref:  (Bt, C, L)  batch tile, input dtype
    # w1_ref: (C, Ch)     first 1x1 conv weight, pre-transposed (Ch = C // reduction)
    # w2_ref: (Ch, C)     second 1x1 conv weight, pre-transposed
    x = x_ref[...]                                         # (Bt, C, L) — input dtype
    bt = x.shape[0]
    inv_l = 1.0 / x.shape[-1]

    # AdaptiveAvgPool1d(1) / AdaptiveMaxPool1d(1): reduce over L; f32 accumulation
    # only on the small (Bt, C) pooled vectors (no f32 copy of the full tile).
    avg = jnp.sum(x, axis=-1, dtype=jnp.float32) * inv_l   # (Bt, C)
    mx = jnp.max(x, axis=-1).astype(jnp.float32)           # (Bt, C)

    # Shared MLP on the stacked pooled matrix: one matmul pair instead of two
    # serialized tiny ones. MXU shape tuning is pointless here (memory-bound op).
    pooled = jnp.concatenate([avg, mx], axis=0)            # (2*Bt, C)
    h = jnp.dot(pooled, w1_ref[...], preferred_element_type=jnp.float32)  # (2*Bt, Ch)
    h = jnp.maximum(h, 0.0)                                 # ReLU
    y = jnp.dot(h, w2_ref[...], preferred_element_type=jnp.float32)       # (2*Bt, C)

    att = jax.nn.sigmoid(y[:bt] + y[bt:]).astype(x.dtype)   # (Bt, C)
    # Second (and last) VMEM pass over the tile: broadcast scale over L.
    o_ref[...] = (x * att[:, :, None]).astype(o_ref.dtype)


def _hw_params():
    """Best-effort (num_tensorcores, vmem_capacity_bytes) for the current chip."""
    try:
        vmem_cap = int(pltpu.get_tpu_info().vmem_capacity_bytes)
    except Exception:
        vmem_cap = 128 << 20  # v5e/v6e-style default if the query is unavailable
    # v7x: 64 MiB VMEM per TensorCore and 2 TCs per chip; v5e/v6e: 128 MiB, 1 TC.
    num_tc = 2 if vmem_cap <= (64 << 20) else 1
    return num_tc, vmem_cap


def channel_attention(x, w1, w2, *, tile_budget_bytes=8 << 20):
    """x: (B, C, L); w1: (Ch, C, 1); w2: (C, Ch, 1)  (PyTorch Conv1d weights, bias=False)."""
    B, C, L = x.shape
    Ch = w1.shape[0]
    num_tc, vmem_cap = _hw_params()

    # Glue: squeeze the k=1 dim and transpose so the kernel does plain row-major matmuls.
    w1_t = jnp.transpose(w1[:, :, 0], (1, 0))  # (C, Ch)
    w2_t = jnp.transpose(w2[:, :, 0], (1, 0))  # (Ch, C)

    itemsize = jnp.dtype(x.dtype).itemsize
    per_b_bytes = C * L * itemsize

    # Batch tile: as large as the per-buffer slab budget allows (fewer grid steps ->
    # less per-step overhead). Only on 2-TC chips (v7x) cap to keep >= 2 steps.
    bt_budget = max(1, tile_budget_bytes // per_b_bytes)
    if num_tc >= 2 and B >= 2:
        bt_budget = min(bt_budget, max(1, B // 2))
    bt = int(min(B, bt_budget))

    num_steps = int(pl.cdiv(B, bt))
    # On 2-TC chips keep the step count even so the 'parallel' grid splits evenly.
    if num_tc >= 2 and num_steps > 1 and num_steps % 2 == 1:
        num_steps += 1
    b_pad = num_steps * bt
    x_in = jnp.pad(x, ((0, b_pad - B), (0, 0), (0, 0))) if b_pad != B else x

    # Real VMEM footprint: double-buffered input slab + double-buffered output slab
    # + tiny resident weights. Always set the limit explicitly (v5e's 16 MiB scoped
    # default would otherwise already be exceeded at an 8 MiB slab).
    w_bytes = 2 * 2 * C * Ch * jnp.dtype(w1_t.dtype).itemsize
    est_vmem = 4 * bt * per_b_bytes + w_bytes + (2 << 20)
    vmem_limit = int(min(max(est_vmem, 1 << 20),
                         max(vmem_cap - (20 << 20), 32 << 20)))
    # TODO(synk): if a single (1, C, L) slab exceeds the VMEM limit, add an L-chunked
    # two-pass streaming path (memory_space=pl.ANY + manual DMA: pass 1 accumulates
    # sum/max, pass 2 re-streams and scales) instead of relying on vmem_limit_bytes.

    cost = pl.CostEstimate(
        flops=int(8 * b_pad * C * Ch + 3 * b_pad * C * L),
        transcendentals=int(b_pad * C),
        bytes_accessed=int(2 * b_pad * per_b_bytes + w_bytes),
    )

    out = pl.pallas_call(
        channel_attention_kernel,
        out_shape=jax.ShapeDtypeStruct((b_pad, C, L), x.dtype),
        grid=(num_steps,),
        in_specs=[
            pl.BlockSpec((bt, C, L), lambda b: (b, 0, 0)),
            # Constant index_map => tiny weights fetched once, resident across the grid.
            pl.BlockSpec((C, Ch), lambda b: (0, 0)),
            pl.BlockSpec((Ch, C), lambda b: (0, 0)),
        ],
        # TODO(synk): for L % 128 != 0 the row stores are masked (vst.msk); a
        # lane-dense (bt, C*L) output view would need a relayout-safe in-kernel
        # reshape and is left out to keep lowering robust.
        out_specs=pl.BlockSpec((bt, C, L), lambda b: (b, 0, 0)),
        compiler_params=pltpu.CompilerParams(
            dimension_semantics=("parallel",),
            vmem_limit_bytes=vmem_limit,
        ),
        cost_estimate=cost,
    )(x_in, w1_t, w2_t)

    return out[:B] if b_pad != B else out


def channel_attention_ref(x, w1, w2):
    """Pure-JAX reference mirroring the PyTorch forward."""
    avg = jnp.mean(x, axis=-1, keepdims=True)  # (B, C, 1)
    mx = jnp.max(x, axis=-1, keepdims=True)    # (B, C, 1)

    def mlp(v):  # v: (B, C, 1)
        h = jnp.einsum("oc,bcl->bol", w1[:, :, 0], v)
        h = jnp.maximum(h, 0.0)
        return jnp.einsum("oc,bcl->bol", w2[:, :, 0], h)

    att = jax.nn.sigmoid(mlp(avg) + mlp(mx))   # (B, C, 1)
    return x * att


if __name__ == "__main__":
    key = jax.random.PRNGKey(0)
    kx, k1, k2, kx2 = jax.random.split(key, 4)

    # Primary check: lane-dense L (multiple of 128), small realistic shape.
    B, C, L = 2, 32, 128
    reduction = 16
    Ch = C // reduction  # 2
    x = jax.random.normal(kx, (B, C, L), dtype=jnp.float32)
    w1 = jax.random.normal(k1, (Ch, C, 1), dtype=jnp.float32) * 0.1
    w2 = jax.random.normal(k2, (C, Ch, 1), dtype=jnp.float32) * 0.1

    out = jax.block_until_ready(channel_attention(x, w1, w2))
    ref = channel_attention_ref(x, w1, w2)
    assert out.shape == (B, C, L)
    assert jnp.allclose(out, ref, atol=1e-5, rtol=1e-5), "mismatch vs reference (aligned)"

    # Secondary check: odd batch with a tiny tile budget exercises the cdiv grid +
    # batch-padding path.
    B2 = 3
    x2 = jax.random.normal(kx2, (B2, C, L), dtype=jnp.float32)
    out2 = jax.block_until_ready(
        channel_attention(x2, w1, w2, tile_budget_bytes=2 * C * L * 4))
    ref2 = channel_attention_ref(x2, w1, w2)
    assert out2.shape == (B2, C, L)
    assert jnp.allclose(out2, ref2, atol=1e-5, rtol=1e-5), "mismatch vs reference (padded)"

    print("KERNEL_OK")
</pallas_src>

<mosaic_0001>
module attributes {stable_mosaic.version = 11 : i64} {
  func.func @channel_attention_kernel(%arg0: i32, %arg1: memref<2x32x128xf32, #tpu.memory_space<vmem>>, %arg2: memref<32x2xf32, #tpu.memory_space<vmem>>, %arg3: memref<2x32xf32, #tpu.memory_space<vmem>>, %arg4: memref<2x32x128xf32, #tpu.memory_space<vmem>>) attributes {dimension_semantics = [#tpu.dimension_semantics<parallel>], iteration_bounds = array<i64: 1>, scalar_prefetch = 0 : i64, scratch_operands = 0 : i64, tpu.core_type = #tpu.core_type<tc>, window_params = [{transform_indices = @transform_0, window_bounds = array<i64: 2, 32, 128>}, {pipeline_mode = #tpu.pipeline_mode<synchronous>, transform_indices = @transform_1, window_bounds = array<i64: 32, 2>}, {pipeline_mode = #tpu.pipeline_mode<synchronous>, transform_indices = @transform_2, window_bounds = array<i64: 2, 32>}, {transform_indices = @transform_3, window_bounds = array<i64: 2, 32, 128>}]} {
    %c0 = arith.constant 0 : index
    %c0_0 = arith.constant 0 : index
    %c0_1 = arith.constant 0 : index
    %0 = vector.load %arg1[%c0, %c0_0, %c0_1] : memref<2x32x128xf32, #tpu.memory_space<vmem>>, vector<2x32x128xf32>
    %cst = arith.constant dense<0.000000e+00> : vector<2x32xf32>
    %1 = vector.multi_reduction <add>, %0, %cst [2] : vector<2x32x128xf32> to vector<2x32xf32>
    %cst_2 = arith.constant 7.812500e-03 : f32
    %2 = vector.broadcast %cst_2 : f32 to vector<2x32xf32>
    %3 = arith.mulf %1, %2 : vector<2x32xf32>
    %cst_3 = arith.constant dense<0xFF800000> : vector<2x32xf32>
    %4 = vector.multi_reduction <maximumf>, %0, %cst_3 [2] : vector<2x32x128xf32> to vector<2x32xf32>
    %5 = tpu.concatenate %3, %4 in 0 : vector<2x32xf32>, vector<2x32xf32> -> vector<4x32xf32>
    %c0_4 = arith.constant 0 : index
    %c0_5 = arith.constant 0 : index
    %6 = vector.load %arg2[%c0_4, %c0_5] : memref<32x2xf32, #tpu.memory_space<vmem>>, vector<32x2xf32>
    %cst_6 = arith.constant dense<0.000000e+00> : vector<4x2xf32>
    %7 = tpu.matmul %5, %6, %cst_6 {dimension_numbers = #tpu.dot_dimension_numbers<[1], [0], [0], [1], [0, 0, 1, 1], [], []>} : vector<4x32xf32>, vector<32x2xf32>, vector<4x2xf32> -> vector<4x2xf32>
    %cst_7 = arith.constant 0.000000e+00 : f32
    %8 = vector.broadcast %cst_7 : f32 to vector<4x2xf32>
    %9 = arith.maximumf %7, %8 : vector<4x2xf32>
    %c0_8 = arith.constant 0 : index
    %c0_9 = arith.constant 0 : index
    %10 = vector.load %arg3[%c0_8, %c0_9] : memref<2x32xf32, #tpu.memory_space<vmem>>, vector<2x32xf32>
    %cst_10 = arith.constant dense<0.000000e+00> : vector<4x32xf32>
    %11 = tpu.matmul %9, %10, %cst_10 {dimension_numbers = #tpu.dot_dimension_numbers<[1], [0], [0], [1], [0, 0, 1, 1], [], []>} : vector<4x2xf32>, vector<2x32xf32>, vector<4x32xf32> -> vector<4x32xf32>
    %12 = vector.extract_strided_slice %11 {offsets = [0, 0], sizes = [2, 32], strides = [1, 1]} : vector<4x32xf32> to vector<2x32xf32>
    %13 = vector.extract_strided_slice %11 {offsets = [2, 0], sizes = [2, 32], strides = [1, 1]} : vector<4x32xf32> to vector<2x32xf32>
    %14 = arith.addf %12, %13 : vector<2x32xf32>
    %15 = arith.negf %14 : vector<2x32xf32>
    %16 = math.exp %15 : vector<2x32xf32>
    %cst_11 = arith.constant 1.000000e+00 : f32
    %17 = vector.broadcast %cst_11 : f32 to vector<2x32xf32>
    %18 = arith.addf %17, %16 : vector<2x32xf32>
    %19 = arith.divf %17, %18 : vector<2x32xf32>
    %20 = vector.shape_cast %19 : vector<2x32xf32> to vector<2x32x1xf32>
    %21 = vector.broadcast %20 : vector<2x32x1xf32> to vector<2x32x128xf32>
    %22 = arith.mulf %0, %21 : vector<2x32x128xf32>
    %c0_12 = arith.constant 0 : index
    %c0_13 = arith.constant 0 : index
    %c0_14 = arith.constant 0 : index
    %23 = vector.load %arg4[%c0_12, %c0_13, %c0_14] : memref<2x32x128xf32, #tpu.memory_space<vmem>>, vector<2x32x128xf32>
    tpu.vector_store %arg4[%c0_12, %c0_13, %c0_14], %22 {strides = array<i32>} : memref<2x32x128xf32, #tpu.memory_space<vmem>>, vector<2x32x128xf32>,
    return
  }
  func.func @transform_0(%arg0: i32) -> (i32, i32, i32) {
    %c0_i32 = arith.constant 0 : i32
    %c0_i32_0 = arith.constant 0 : i32
    %c0_i32_1 = arith.constant 0 : i32
    return %arg0, %c0_i32, %c0_i32_0 : i32, i32, i32
  }
  func.func @transform_1(%arg0: i32) -> (i32, i32) {
    %c0_i32 = arith.constant 0 : i32
    %c0_i32_0 = arith.constant 0 : i32
    %c0_i32_1 = arith.constant 0 : i32
    return %c0_i32, %c0_i32_0 : i32, i32
  }
  func.func @transform_2(%arg0: i32) -> (i32, i32) {
    %c0_i32 = arith.constant 0 : i32
    %c0_i32_0 = arith.constant 0 : i32
    %c0_i32_1 = arith.constant 0 : i32
    return %c0_i32, %c0_i32_0 : i32, i32
  }
  func.func @transform_3(%arg0: i32) -> (i32, i32, i32) {
    %c0_i32 = arith.constant 0 : i32
    %c0_i32_0 = arith.constant 0 : i32
    %c0_i32_1 = arith.constant 0 : i32
    return %arg0, %c0_i32, %c0_i32_0 : i32, i32, i32
  }
}

</mosaic_0001>

<llo_original>
// kernel: tpu_custom_call.1
$region0: #{tpu_custom_call.1}
  #allocation0 [shape = 'u32[]', space=smem, size = 0x4, offset = 0x4, fixed_abs, tag = 'smem constant byte address 0x4 - core index']
  #allocation1 [shape = 'u32[72,128]{1,0:T(1,128)}', space=vmem, size = 0x9000, scoped, tag = 'internal scratch']
  %s0 = inlined_call_operand.hbm [shape: f32[2,32,128], index: 0, kind: input, shape index: {}]
  %s1 = inlined_call_operand.vmem [shape: f32[32,2], index: 1, kind: input, shape index: {}]
  %s2 = inlined_call_operand.vmem [shape: f32[2,32], index: 2, kind: input, shape index: {}]
  %s3 = inlined_call_operand.hbm [shape: f32[2,32,128], index: 3, kind: output, shape index: {}]
  %s4 = sld [smem:[#allocation0]]
  $region26: #{tpu_custom_call.1} parent=0
    _
  %s6 = ssub.s32 1, %s4
  %s7 = scalar_select 0, %s6, %s4
  $region1: #{tpu_custom_call.1} parent=0
    #allocation2 [shape = 'u8[32768]{0}', space=vmem, size = 0x8000, scoped, tag = 'input window, operand 0, single buffered']
    #allocation3 [shape = 's32[1]{0}', space=sflag, size = 0x4, scoped, tag = 'scoped memory for tpu_custom_call.1']
    #allocation4 [shape = 's32[1]{0}', space=sflag, size = 0x4, scoped, tag = 'scoped memory for tpu_custom_call.1']
    #allocation5 [shape = 'u8[32768]{0}', space=vmem, size = 0x8000, scoped, tag = 'output window, operand 0, single buffered']
    %8 = vsyncpa [#allocation3], 0
    %9 = vsyncpa [#allocation4], 0
    // Predicated region
    $region2: #{tpu_custom_call.1} parent=1 // pred_check
      _
    $region3: #{tpu_custom_call.1} parent=1 // pred_check_branch
      %11 = sbr.rel (0) target = $region5
    $region4: #{tpu_custom_call.1} parent=1 // pred_region
      %13 = vsyncadd [#allocation3], 0
      %s14 = sshll.u32 %s0, 4
      %s15 = int_to_ptr.hbm [resolvable:$true] %s14
      %s16 = sshll.u32 [#allocation2], 4
      %s17 = int_to_ptr.vmem [resolvable:$true] %s16
      %22 = dma.hbm_to_vmem [thread:$0]  %s15, 1024, %s17, [#allocation3], 128, 128, 8
    $region5: #{tpu_custom_call.1} parent=1 // pred_fallthru
      _
    // Predicated region
    $region6: #{tpu_custom_call.1} parent=1 // pred_check
      _
    $region7: #{tpu_custom_call.1} parent=1 // pred_check_branch
      %24 = sbr.rel (0) target = $region9
    $region8: #{tpu_custom_call.1} parent=1 // pred_region
      _
    $region9: #{tpu_custom_call.1} parent=1 // pred_fallthru
      _
    // Predicated region
    $region10: #{tpu_custom_call.1} parent=1 // pred_check
      _
    $region11: #{tpu_custom_call.1} parent=1 // pred_check_branch
      %26 = sbr.rel (0) target = $region13
    $region12: #{tpu_custom_call.1} parent=1 // pred_region
      _
    $region13: #{tpu_custom_call.1} parent=1 // pred_fallthru
      _
    // Predicated region
    $region14: #{tpu_custom_call.1} parent=1 // pred_check
      _
    $region15: #{tpu_custom_call.1} parent=1 // pred_check_branch
      %28 = sbr.rel (0) target = $region17
    $region16: #{tpu_custom_call.1} parent=1 // pred_region
      %30 = dma.done [#allocation3], 1024
    $region17: #{tpu_custom_call.1} parent=1 // pred_fallthru
      _
    %v31 = vld [vmem:[#allocation2] sm:$0xff]
    %v32 = vld [vmem:[#allocation2 + $0x8] sm:$0xff]
    %v33 = vld [vmem:[#allocation2 + $0x10] sm:$0xff]
    %v34 = vld [vmem:[#allocation2 + $0x18] sm:$0xff]
    %v35 = vld [vmem:[#allocation2 + $0x20] sm:$0xff]
    %v36 = vld [vmem:[#allocation2 + $0x28] sm:$0xff]
    %v37 = vld [vmem:[#allocation2 + $0x30] sm:$0xff]
    %v38 = vld [vmem:[#allocation2 + $0x38] sm:$0xff]
    %39 = vadd.xlane.f32.xlu0 %v31
    %v40 = vpop.xlane.xlu0 %39
    %41 = vadd.xlane.f32.xlu0 %v32
    %v42 = vpop.xlane.xlu0 %41
    %43 = vadd.xlane.f32.xlu0 %v33
    %v44 = vpop.xlane.xlu0 %43
    %45 = vadd.xlane.f32.xlu0 %v34
    %v46 = vpop.xlane.xlu0 %45
    %47 = vadd.xlane.f32.xlu0 %v35
    %v48 = vpop.xlane.xlu0 %47
    %49 = vadd.xlane.f32.xlu0 %v36
    %v50 = vpop.xlane.xlu0 %49
    %51 = vadd.xlane.f32.xlu0 %v37
    %v52 = vpop.xlane.xlu0 %51
    %53 = vadd.xlane.f32.xlu0 %v38
    %v54 = vpop.xlane.xlu0 %53
    %v55 = vmul.f32 %v40, 0.0078125
    %v56 = vmul.f32 %v42, 0.0078125
    %v57 = vmul.f32 %v44, 0.0078125
    %v58 = vmul.f32 %v46, 0.0078125
    %v59 = vmul.f32 %v48, 0.0078125
    %v60 = vmul.f32 %v50, 0.0078125
    %v61 = vmul.f32 %v52, 0.0078125
    %v62 = vmul.f32 %v54, 0.0078125
    %63 = vmax.xlane.f32.xlu0 %v31
    %v64 = vpop.xlane.xlu0 %63
    %65 = vmax.xlane.f32.xlu0 %v32
    %v66 = vpop.xlane.xlu0 %65
    %67 = vmax.xlane.f32.xlu0 %v33
    %v68 = vpop.xlane.xlu0 %67
    %69 = vmax.xlane.f32.xlu0 %v34
    %v70 = vpop.xlane.xlu0 %69
    %71 = vmax.xlane.f32.xlu0 %v35
    %v72 = vpop.xlane.xlu0 %71
    %73 = vmax.xlane.f32.xlu0 %v36
    %v74 = vpop.xlane.xlu0 %73
    %75 = vmax.xlane.f32.xlu0 %v37
    %v76 = vpop.xlane.xlu0 %75
    %77 = vmax.xlane.f32.xlu0 %v38
    %v78 = vpop.xlane.xlu0 %77
    %v87 = vlaneseq
    %v88 = vand.u32 %v87, 127
    %v89 = vperm.slane %v55, %v88
    %v90 = vadd.s32 %v88, 4294967288
    %v91 = vperm.slane %v56, %v90
    %vm92 = vcmask 130112
    %v93 = vsel %vm92, %v91, %v89
    %v94 = vadd.s32 %v88, 4294967280
    %v95 = vperm.slane %v57, %v94
    %vm96 = vcmask 195712
    %v97 = vsel %vm96, %v95, %v93
    %v98 = vadd.s32 %v88, 4294967272
    %v99 = vperm.slane %v58, %v98
    %vm100 = vcmask 261312
    %v101 = vsel %vm100, %v99, %v97
    %v102 = vperm.slane %v59, %v88
    %v103 = vperm.slane %v60, %v90
    %v104 = vsel %vm92, %v103, %v102
    %v105 = vperm.slane %v61, %v94
    %v106 = vsel %vm96, %v105, %v104
    %v107 = vperm.slane %v62, %v98
    %v108 = vsel %vm100, %v107, %v106
    %vm109 = vcmask 1041409
    %v110 = vsel %vm109, %v108, %v101
    %v120 = vperm.slane %v64, %v88
    %v121 = vperm.slane %v66, %v90
    %v122 = vsel %vm92, %v121, %v120
    %v123 = vperm.slane %v68, %v94
    %v124 = vsel %vm96, %v123, %v122
    %v125 = vperm.slane %v70, %v98
    %v126 = vsel %vm100, %v125, %v124
    %v127 = vperm.slane %v72, %v88
    %v128 = vperm.slane %v74, %v90
    %v129 = vsel %vm92, %v128, %v127
    %v130 = vperm.slane %v76, %v94
    %v131 = vsel %vm96, %v130, %v129
    %v132 = vperm.slane %v78, %v98
    %v133 = vsel %vm100, %v132, %v131
    %vm134 = vcmask 1043459
    %v135 = vsel %vm134, %v133, %v126
    %vm137 = vcmask 1041408
    %v138 = vsel %vm137, %v110, %v135
    %v139 = vld [vmem:[%s1] sm:$0xff]
    %v140 = vld [vmem:[%s1 + $0x8] sm:$0xff]
    %v141 = vld [vmem:[%s1 + $0x10] sm:$0xff]
    %v142 = vld [vmem:[%s1 + $0x18] sm:$0xff]
    %vm143 = vcmask 261120
    %v145 = vsel %vm143, %v138, 0
    %147 = vmatpush.msra.mxu0 0.0
    %148 = vmatpush.msra.mxu0 0.0
    %149 = vmatpush.msra.mxu0 0.0
    %150 = vmatpush.msra.mxu0 0.0
    %151 = vmatpush.msra.mxu0 0.0
    %152 = vmatpush.msra.mxu0 0.0
    %153 = vmatpush.msra.mxu0 0.0
    %154 = vmatpush.msra.mxu0 0.0
    %155 = vmatpush.msra.mxu0 0.0
    %156 = vmatpush.msra.mxu0 0.0
    %157 = vmatpush.msra.mxu0 0.0
    %158 = vmatpush.msra.mxu0 0.0
    %159 = vmatpush.msra.mxu0 %v142
    %160 = vmatpush.msra.mxu0 %v141
    %161 = vmatpush.msra.mxu0 %v140
    %162 = vmatpush.msra.mxu0 %v139
    %163 = vmatmul.f32.gmra.mxu0 %v145
    %v164 = vpop.f32.mrf.mxu0
    %v165 = vadd.f32 0.0, %v164
    %166 = vdwg.mxu0
    %v167 = vmax.f32 %v165, 0.0
    %v168 = vld [vmem:[%s2] sm:$0x3]
    %vm169 = vcmask 15360
    %v171 = vsel %vm169, %v167, 0
    %v174 = vsel %vm137, %v168, 0
    %176 = vmatpush.msra.mxu0 0.0
    %177 = vmatpush.msra.mxu0 0.0
    %178 = vmatpush.msra.mxu0 0.0
    %179 = vmatpush.msra.mxu0 0.0
    %180 = vmatpush.msra.mxu0 0.0
    %181 = vmatpush.msra.mxu0 0.0
    %182 = vmatpush.msra.mxu0 0.0
    %183 = vmatpush.msra.mxu0 0.0
    %184 = vmatpush.msra.mxu0 0.0
    %185 = vmatpush.msra.mxu0 0.0
    %186 = vmatpush.msra.mxu0 0.0
    %187 = vmatpush.msra.mxu0 0.0
    %188 = vmatpush.msra.mxu0 0.0
    %189 = vmatpush.msra.mxu0 0.0
    %190 = vmatpush.msra.mxu0 0.0
    %191 = vmatpush.msra.mxu0 %v174
    %192 = vmatmul.f32.gmra.mxu0 %v171
    %v193 = vpop.f32.mrf.mxu0
    %v194 = vadd.f32 0.0, %v193
    %195 = vdwg.mxu0
    %v197 = vrot.slane %v194, 2
    %v199 = vadd.f32 %v194, %v197
    %v200 = vxor.u32 %v199, 2147483648
    %v201 = vmul.f32 %v200, 1.442695
    %v202 = vpow.pop %v201
    %v203 = vadd.f32 %v202, 1.0
    %v204 = vrcp.pop %v203
    %v205 = vmul.f32 %v203, %v204
    %v206 = vsub.f32 1.0, %v205
    %v207 = vmul.f32 %v204, %v206
    %v208 = vadd.f32 %v204, %v207
    %vm209 = vweird.f32 %v203
    %vm210 = vweird.f32 %v204
    %vm211 = vmor %vm209, %vm210
    %v212 = vsel %vm211, %v204, %v208
    %v213 = vand.u32 2147483647, %v203
    %vm214 = vcmp.eq.f32.partialorder %v213, 8.507059e+37
    %v215 = vand.u32 %v203, 2147483648
    %v216 = vor.u32 1.1754944e-38, %v215
    %v217 = vsel %vm214, %v216, %v212
    %v218 = vmul.f32 1.0, %v217
    %v219 = vperm.slane %v218, 0
    %v220 = vlaneseq
    %v221 = vshrl.u32 %v220, 7
    %223 = vset.pattern.permute.xlu0 %v221
    %224 = vperm.xlu0 %223, %v219
    %v225 = vpop.permute.xlu0 %224
    %v226 = vlaneseq
    %v227 = vshrl.u32 %v226, 7
    %v228 = vadd.s32 %v227, 8
    %229 = vset.pattern.permute.xlu0 %v228
    %230 = vperm.xlu0 %229, %v219
    %v231 = vpop.permute.xlu0 %230
    %v232 = vlaneseq
    %v233 = vshrl.u32 %v232, 7
    %v234 = vadd.s32 %v233, 16
    %235 = vset.pattern.permute.xlu0 %v234
    %236 = vperm.xlu0 %235, %v219
    %v237 = vpop.permute.xlu0 %236
    %v238 = vlaneseq
    %v239 = vshrl.u32 %v238, 7
    %v240 = vadd.s32 %v239, 24
    %241 = vset.pattern.permute.xlu0 %v240
    %242 = vperm.xlu0 %241, %v219
    %v243 = vpop.permute.xlu0 %242
    %v244 = vperm.slane %v218, 1
    %v245 = vlaneseq
    %v246 = vshrl.u32 %v245, 7
    %248 = vset.pattern.permute.xlu0 %v246
    %249 = vperm.xlu0 %248, %v244
    %v250 = vpop.permute.xlu0 %249
    %v251 = vlaneseq
    %v252 = vshrl.u32 %v251, 7
    %v253 = vadd.s32 %v252, 8
    %254 = vset.pattern.permute.xlu0 %v253
    %255 = vperm.xlu0 %254, %v244
    %v256 = vpop.permute.xlu0 %255
    %v257 = vlaneseq
    %v258 = vshrl.u32 %v257, 7
    %v259 = vadd.s32 %v258, 16
    %260 = vset.pattern.permute.xlu0 %v259
    %261 = vperm.xlu0 %260, %v244
    %v262 = vpop.permute.xlu0 %261
    %v263 = vlaneseq
    %v264 = vshrl.u32 %v263, 7
    %v265 = vadd.s32 %v264, 24
    %266 = vset.pattern.permute.xlu0 %v265
    %267 = vperm.xlu0 %266, %v244
    %v268 = vpop.permute.xlu0 %267
    %v269 = vmul.f32 %v31, %v225
    %v270 = vmul.f32 %v32, %v231
    %v271 = vmul.f32 %v33, %v237
    %v272 = vmul.f32 %v34, %v243
    %v273 = vmul.f32 %v35, %v250
    %v274 = vmul.f32 %v36, %v256
    %v275 = vmul.f32 %v37, %v262
    %v276 = vmul.f32 %v38, %v268
    %277 = vst [vmem:[#allocation5] sm:$0xff] %v269
    %278 = vst [vmem:[#allocation5 + $0x8] sm:$0xff] %v270
    %279 = vst [vmem:[#allocation5 + $0x10] sm:$0xff] %v271
    %280 = vst [vmem:[#allocation5 + $0x18] sm:$0xff] %v272
    %281 = vst [vmem:[#allocation5 + $0x20] sm:$0xff] %v273
    %282 = vst [vmem:[#allocation5 + $0x28] sm:$0xff] %v274
    %283 = vst [vmem:[#allocation5 + $0x30] sm:$0xff] %v275
    %284 = vst [vmem:[#allocation5 + $0x38] sm:$0xff] %v276
    // Predicated region
    $region18: #{tpu_custom_call.1} parent=1 // pred_check
      _
    $region19: #{tpu_custom_call.1} parent=1 // pred_check_branch
      %286 = sbr.rel (0) target = $region21
    $region20: #{tpu_custom_call.1} parent=1 // pred_region
      %288 = vsyncadd [#allocation4], 0
      %s289 = sshll.u32 [#allocation5], 4
      %s290 = int_to_ptr.vmem [resolvable:$true] %s289
      %s291 = sshll.u32 %s3, 4
      %s292 = int_to_ptr.hbm [resolvable:$true] %s291
      %297 = dma.vmem_to_hbm [thread:$0]  %s290, 1024, %s292, [#allocation4], 128, 128, 8
    $region21: #{tpu_custom_call.1} parent=1 // pred_fallthru
      _
    // Predicated region
    $region22: #{tpu_custom_call.1} parent=1 // pred_check
      _
    $region23: #{tpu_custom_call.1} parent=1 // pred_check_branch
      %299 = sbr.rel (0) target = $region25
    $region24: #{tpu_custom_call.1} parent=1 // pred_region
      %301 = dma.done [#allocation4], 1024
    $region25: #{tpu_custom_call.1} parent=1 // pred_fallthru
      _
    %302 = vsyncpa [#allocation3], 1
    %303 = vsyncpa [#allocation4], 1

</llo_original>
